<compile_context>
chip_gen: v5e
topology: v5e:2x2
jax: 0.10.0
libtpu: 0.0.40
codegen_flags: <defaults>
</compile_context>

<pallas_src>
import functools

import jax
import jax.numpy as jnp
from jax import lax
from jax.experimental import pallas as pl
from jax.experimental.pallas import tpu as pltpu


def _round_up(x, m):
    return ((x + m - 1) // m) * m


def _mlp_critic_kernel(num_hidden, sub_chunk, x_ref, *refs):
    """Fused MLP critic: (num_hidden x [Linear+ReLU]) -> Linear(hidden -> 1).

    refs layout: w0T, b0, w1T, b1, ..., w_out, b_out, out_ref
      wiT:   (out_i, in_i)            VMEM, MXU dtype (bf16 by default)
      bi:    (out_i, 1)               VMEM f32
      w_out: (1, hidden)              VMEM, MXU dtype
      b_out: (1, 1)                   VMEM f32
      out:   (chunks_per_tile, sub_chunk) VMEM f32  (batch on the lane axis)
    """
    out_ref = refs[-1]
    params = refs[:-1]

    batch_tile = x_ref.shape[0]
    num_chunks = batch_tile // sub_chunk

    # Tiny parameters: loaded once per grid step (VMEM-resident, constant maps).
    wts = [params[2 * i][...] for i in range(num_hidden)]        # (out, in)
    w_out = params[-2][...]                                      # (1, hidden)
    # Hoist the lane-broadcasts of the biases out of the chunk loop
    # (JAX does not CSE broadcast_in_dim; unrolled chunks would repeat them).
    bias_bc = [
        jnp.broadcast_to(params[2 * i + 1][...],
                         (params[2 * i + 1].shape[0], sub_chunk))
        for i in range(num_hidden)
    ]
    b_out_bc = jnp.broadcast_to(params[-1][...], (1, sub_chunk))

    def process_chunk(c):
        row0 = c * sub_chunk
        if not isinstance(c, int):
            row0 = pl.multiple_of(row0, sub_chunk)
        # f32 rows straight off the DMA'd tile; one XLU transpose per chunk
        # puts the batch on the 128-lane axis for the whole MLP (lane-dense
        # activations; the final result is already lane-dense for the store).
        x_chunk = x_ref[pl.ds(row0, sub_chunk), :]               # (sub, in) f32
        h_t = jnp.transpose(x_chunk).astype(wts[0].dtype)        # (in, sub)
        for w, b in zip(wts, bias_bc):
            # bf16 x bf16 MXU matmul with f32 accumulation; bias + ReLU on the
            # f32 accumulator (v5e VPU has no bf16), single cast for next dot.
            acc = jnp.dot(w, h_t, preferred_element_type=jnp.float32)
            acc = jnp.maximum(acc + b, 0.0)                      # ReLU assumed
            h_t = acc.astype(w.dtype)
        val = jnp.dot(w_out, h_t,
                      preferred_element_type=jnp.float32) + b_out_bc
        out_ref[pl.ds(c, 1), :] = val                            # (1, sub_chunk)

    if num_chunks <= 4:
        # Short fixed trip-count: full static unroll (LLO scheduler visibility).
        for c in range(num_chunks):
            process_chunk(c)
    else:
        # Many chunks: bounded live ranges via fori_loop, light unroll.
        def body(c, carry):
            process_chunk(c)
            return carry
        lax.fori_loop(0, num_chunks, body, 0, unroll=2)


def state_critic_forward(x, params, *, batch_tile=None, sub_chunk=256,
                         mxu_dtype=jnp.bfloat16):
    """x: (B, input_dim) float32. Returns (B, 1) float32.

    mxu_dtype=jnp.bfloat16 feeds the MXU bf16 operands with f32 accumulation
    (recommended); pass jnp.float32 for exact module-precision compute.
    """
    B, input_dim = x.shape
    hidden_dim = params["ws"][0].shape[1]
    num_hidden = len(params["ws"])
    assert num_hidden >= 1, "StateCritic requires num_layers >= 2"

    # ---- tile selection -----------------------------------------------------
    if batch_tile is None:
        # MiB-scale DMA tiles amortize the ~0.35us/step overhead, while keeping
        # >=2 grid steps when B allows (both v7x TensorCores get work) and the
        # double-buffered VMEM footprint tiny on every generation
        # (<= 2 x 4096 x 128 lanes x 4B = 4 MiB on v5e/v6e/v7x).
        batch_tile = min(max(_round_up(pl.cdiv(B, 2), 256), 256), 4096)
    sub_chunk = min(sub_chunk, batch_tile)   # sub_chunk=256 suits v6e/v7x MXU
    assert batch_tile % sub_chunk == 0 and sub_chunk % 128 == 0
    num_tiles = pl.cdiv(B, batch_tile)       # no jnp.pad: last block is partial
    chunks_per_tile = batch_tile // sub_chunk

    # ---- parameters (KB-sized; cast/transpose once, fully VMEM resident) ----
    flat = []
    for w, b in zip(params["ws"], params["bs"]):
        flat.append(jnp.asarray(w, jnp.float32).T.astype(mxu_dtype))  # (out, in)
        flat.append(jnp.asarray(b, jnp.float32).reshape(-1, 1))       # (out, 1)
    flat.append(jnp.asarray(params["w_out"], jnp.float32)
                .reshape(1, hidden_dim).astype(mxu_dtype))            # (1, h)
    flat.append(jnp.asarray(params["b_out"], jnp.float32).reshape(1, 1))

    in_specs = [pl.BlockSpec((batch_tile, input_dim), lambda i: (i, 0))]
    in_specs += [pl.BlockSpec(p.shape, lambda i: (0, 0)) for p in flat]

    # Lane-dense output: each grid step writes a full (chunks_per_tile,
    # sub_chunk) slab (batch on the 128-lane axis -> unmasked vector stores).
    out_specs = pl.BlockSpec((None, chunks_per_tile, sub_chunk),
                             lambda i: (i, 0, 0))
    out_shape = jax.ShapeDtypeStruct((num_tiles, chunks_per_tile, sub_chunk),
                                     jnp.float32)

    # Advisory cost estimate so XLA can schedule/overlap this tiny custom call.
    flops = 2 * B * (input_dim * hidden_dim
                     + (num_hidden - 1) * hidden_dim * hidden_dim
                     + hidden_dim)
    param_bytes = sum(int(p.size) * p.dtype.itemsize for p in flat)
    bytes_accessed = (B * input_dim * x.dtype.itemsize
                      + num_tiles * batch_tile * 4 + param_bytes)
    cost = pl.CostEstimate(flops=int(flops), transcendentals=0,
                           bytes_accessed=int(bytes_accessed))

    kernel = functools.partial(_mlp_critic_kernel, num_hidden, sub_chunk)

    out3 = pl.pallas_call(
        kernel,
        out_shape=out_shape,
        grid_spec=pltpu.PrefetchScalarGridSpec(
            num_scalar_prefetch=0,
            grid=(num_tiles,),
            in_specs=in_specs,
            out_specs=out_specs),
        compiler_params=pltpu.CompilerParams(
            # TODO(synk): if profiling shows a single-TC run on v7x, switch to
            # pltpu.CORE_PARALLEL / pl.core_map for explicit core sharding.
            dimension_semantics=("parallel",)),
        cost_estimate=cost,
    )(x, *flat)

    # Layout plumbing back to the module's (B, 1) output (free reshape/slice;
    # elements past B correspond to the partial last block and are dropped).
    return out3.reshape(-1)[:B].reshape(B, 1)


def init_state_critic_params(key, input_dim, hidden_dim, num_layers):
    """PyTorch nn.Linear default init: U(-k, k), k = 1/sqrt(fan_in)."""
    num_hidden = num_layers - 1          # UniformLinearNetwork depth
    ws, bs = [], []
    in_dim = input_dim
    for _ in range(num_hidden):
        key, kw, kb = jax.random.split(key, 3)
        bound = 1.0 / jnp.sqrt(in_dim)
        ws.append(jax.random.uniform(kw, (in_dim, hidden_dim), jnp.float32,
                                     -bound, bound))
        bs.append(jax.random.uniform(kb, (hidden_dim,), jnp.float32,
                                     -bound, bound))
        in_dim = hidden_dim
    key, kw, kb = jax.random.split(key, 3)
    bound = 1.0 / jnp.sqrt(hidden_dim)
    w_out = jax.random.uniform(kw, (hidden_dim,), jnp.float32, -bound, bound)
    b_out = jax.random.uniform(kb, (1,), jnp.float32, -bound, bound)
    return {"ws": ws, "bs": bs, "w_out": w_out, "b_out": b_out}


def state_critic_reference(x, params, mxu_dtype=None):
    """Pure-JAX reference. mxu_dtype=bf16 mirrors the kernel's MXU feed."""
    def mm(a, w):
        if mxu_dtype is not None:
            a = a.astype(mxu_dtype)
            w = w.astype(mxu_dtype)
        return jnp.dot(a, w, preferred_element_type=jnp.float32)

    h = x
    for w, b in zip(params["ws"], params["bs"]):
        h = jnp.maximum(mm(h, w) + b, 0.0)
    return mm(h, params["w_out"].reshape(-1, 1)) + params["b_out"]


if __name__ == "__main__":
    key = jax.random.PRNGKey(0)

    batch = 512        # auto batch_tile=256 -> 2 grid steps (both v7x TCs busy)
    input_dim = 32
    hidden_dim = 32
    num_layers = 3     # -> 2 hidden Linear+ReLU layers in UniformLinearNetwork

    key, kx, kp = jax.random.split(key, 3)
    x = jax.random.normal(kx, (batch, input_dim), jnp.float32)
    params = init_state_critic_params(kp, input_dim, hidden_dim, num_layers)

    out = state_critic_forward(x, params)
    out = jax.block_until_ready(out)
    assert out.shape == (batch, 1)

    # Tight check against a matched-quantization reference (bf16 MXU operands,
    # f32 accumulation -- exactly what the kernel does).
    ref_bf16 = state_critic_reference(x, params, mxu_dtype=jnp.bfloat16)
    assert jnp.allclose(out, ref_bf16, atol=2e-3, rtol=2e-3), (
        float(jnp.max(jnp.abs(out - ref_bf16))))

    # Loose sanity check against the unquantized f32 module semantics, so the
    # true deviation from the PyTorch StateCritic is actually measured.
    ref_f32 = state_critic_reference(x, params)
    assert jnp.allclose(out, ref_f32, atol=5e-2, rtol=5e-2), (
        float(jnp.max(jnp.abs(out - ref_f32))))

    print("KERNEL_OK")
</pallas_src>

<mosaic_0001>
module attributes {stable_mosaic.version = 11 : i64} {
  func.func @_mlp_critic_kernel(%arg0: i32, %arg1: memref<256x32xf32, #tpu.memory_space<vmem>>, %arg2: memref<32x32xbf16, #tpu.memory_space<vmem>>, %arg3: memref<32x1xf32, #tpu.memory_space<vmem>>, %arg4: memref<32x32xbf16, #tpu.memory_space<vmem>>, %arg5: memref<32x1xf32, #tpu.memory_space<vmem>>, %arg6: memref<1x32xbf16, #tpu.memory_space<vmem>>, %arg7: memref<1x1xf32, #tpu.memory_space<vmem>>, %arg8: memref<1x1x256xf32, #tpu.memory_space<vmem>>) attributes {dimension_semantics = [#tpu.dimension_semantics<parallel>], iteration_bounds = array<i64: 2>, scalar_prefetch = 0 : i64, scratch_operands = 0 : i64, tpu.core_type = #tpu.core_type<tc>, window_params = [{transform_indices = @transform_0, window_bounds = array<i64: 256, 32>}, {pipeline_mode = #tpu.pipeline_mode<synchronous>, transform_indices = @transform_1, window_bounds = array<i64: 32, 32>}, {pipeline_mode = #tpu.pipeline_mode<synchronous>, transform_indices = @transform_2, window_bounds = array<i64: 32, 1>}, {pipeline_mode = #tpu.pipeline_mode<synchronous>, transform_indices = @transform_3, window_bounds = array<i64: 32, 32>}, {pipeline_mode = #tpu.pipeline_mode<synchronous>, transform_indices = @transform_4, window_bounds = array<i64: 32, 1>}, {pipeline_mode = #tpu.pipeline_mode<synchronous>, transform_indices = @transform_5, window_bounds = array<i64: 1, 32>}, {pipeline_mode = #tpu.pipeline_mode<synchronous>, transform_indices = @transform_6, window_bounds = array<i64: 1, 1>}, {transform_indices = @transform_7, window_bounds = array<i64: 1, 1, 256>}]} {
    %c0 = arith.constant 0 : index
    %c0_0 = arith.constant 0 : index
    %0 = vector.load %arg2[%c0, %c0_0] : memref<32x32xbf16, #tpu.memory_space<vmem>>, vector<32x32xbf16>
    %c0_1 = arith.constant 0 : index
    %c0_2 = arith.constant 0 : index
    %1 = vector.load %arg4[%c0_1, %c0_2] : memref<32x32xbf16, #tpu.memory_space<vmem>>, vector<32x32xbf16>
    %c0_3 = arith.constant 0 : index
    %c0_4 = arith.constant 0 : index
    %2 = vector.load %arg6[%c0_3, %c0_4] : memref<1x32xbf16, #tpu.memory_space<vmem>>, vector<1x32xbf16>
    %c0_5 = arith.constant 0 : index
    %c0_6 = arith.constant 0 : index
    %3 = vector.load %arg3[%c0_5, %c0_6] : memref<32x1xf32, #tpu.memory_space<vmem>>, vector<32x1xf32>
    %4 = vector.shape_cast %3 : vector<32x1xf32> to vector<32x1xf32>
    %5 = vector.broadcast %4 : vector<32x1xf32> to vector<32x256xf32>
    %c0_7 = arith.constant 0 : index
    %c0_8 = arith.constant 0 : index
    %6 = vector.load %arg5[%c0_7, %c0_8] : memref<32x1xf32, #tpu.memory_space<vmem>>, vector<32x1xf32>
    %7 = vector.shape_cast %6 : vector<32x1xf32> to vector<32x1xf32>
    %8 = vector.broadcast %7 : vector<32x1xf32> to vector<32x256xf32>
    %c0_9 = arith.constant 0 : index
    %c0_10 = arith.constant 0 : index
    %9 = vector.load %arg7[%c0_9, %c0_10] : memref<1x1xf32, #tpu.memory_space<vmem>>, vector<1x1xf32>
    %10 = vector.shape_cast %9 : vector<1x1xf32> to vector<1x1xf32>
    %11 = vector.broadcast %10 : vector<1x1xf32> to vector<1x256xf32>
    %c0_11 = arith.constant 0 : index
    %c0_12 = arith.constant 0 : index
    %12 = vector.load %arg1[%c0_11, %c0_12] : memref<256x32xf32, #tpu.memory_space<vmem>>, vector<256x32xf32>
    %13 = tpu.transpose %12, [1, 0] : vector<256x32xf32> -> vector<32x256xf32>
    %14 = arith.truncf %13 : vector<32x256xf32> to vector<32x256xbf16>
    %cst = arith.constant dense<0.000000e+00> : vector<32x256xf32>
    %15 = tpu.matmul %0, %14, %cst {dimension_numbers = #tpu.dot_dimension_numbers<[1], [0], [0], [1], [0, 0, 1, 1], [], []>} : vector<32x32xbf16>, vector<32x256xbf16>, vector<32x256xf32> -> vector<32x256xf32>
    %16 = arith.addf %15, %5 : vector<32x256xf32>
    %cst_13 = arith.constant 0.000000e+00 : f32
    %17 = vector.broadcast %cst_13 : f32 to vector<32x256xf32>
    %18 = arith.maximumf %16, %17 : vector<32x256xf32>
    %19 = arith.truncf %18 : vector<32x256xf32> to vector<32x256xbf16>
    %cst_14 = arith.constant dense<0.000000e+00> : vector<32x256xf32>
    %20 = tpu.matmul %1, %19, %cst_14 {dimension_numbers = #tpu.dot_dimension_numbers<[1], [0], [0], [1], [0, 0, 1, 1], [], []>} : vector<32x32xbf16>, vector<32x256xbf16>, vector<32x256xf32> -> vector<32x256xf32>
    %21 = arith.addf %20, %8 : vector<32x256xf32>
    %cst_15 = arith.constant 0.000000e+00 : f32
    %22 = vector.broadcast %cst_15 : f32 to vector<32x256xf32>
    %23 = arith.maximumf %21, %22 : vector<32x256xf32>
    %24 = arith.truncf %23 : vector<32x256xf32> to vector<32x256xbf16>
    %cst_16 = arith.constant dense<0.000000e+00> : vector<1x256xf32>
    %25 = tpu.matmul %2, %24, %cst_16 {dimension_numbers = #tpu.dot_dimension_numbers<[1], [0], [0], [1], [0, 0, 1, 1], [], []>} : vector<1x32xbf16>, vector<32x256xbf16>, vector<1x256xf32> -> vector<1x256xf32>
    %26 = arith.addf %25, %11 : vector<1x256xf32>
    %c0_17 = arith.constant 0 : index
    %c0_18 = arith.constant 0 : index
    %c0_19 = arith.constant 0 : index
    %27 = vector.load %arg8[%c0_17, %c0_18, %c0_19] : memref<1x1x256xf32, #tpu.memory_space<vmem>>, vector<1x1x256xf32>
    %28 = vector.shape_cast %27 : vector<1x1x256xf32> to vector<1x256xf32>
    %29 = vector.shape_cast %26 : vector<1x256xf32> to vector<1x1x256xf32>
    tpu.vector_store %arg8[%c0_17, %c0_18, %c0_19], %29 {strides = array<i32>} : memref<1x1x256xf32, #tpu.memory_space<vmem>>, vector<1x1x256xf32>,
    return
  }
  func.func @transform_0(%arg0: i32) -> (i32, i32) {
    %c0_i32 = arith.constant 0 : i32
    %c0_i32_0 = arith.constant 0 : i32
    return %arg0, %c0_i32 : i32, i32
  }
  func.func @transform_1(%arg0: i32) -> (i32, i32) {
    %c0_i32 = arith.constant 0 : i32
    %c0_i32_0 = arith.constant 0 : i32
    %c0_i32_1 = arith.constant 0 : i32
    return %c0_i32, %c0_i32_0 : i32, i32
  }
  func.func @transform_2(%arg0: i32) -> (i32, i32) {
    %c0_i32 = arith.constant 0 : i32
    %c0_i32_0 = arith.constant 0 : i32
    %c0_i32_1 = arith.constant 0 : i32
    return %c0_i32, %c0_i32_0 : i32, i32
  }
  func.func @transform_3(%arg0: i32) -> (i32, i32) {
    %c0_i32 = arith.constant 0 : i32
    %c0_i32_0 = arith.constant 0 : i32
    %c0_i32_1 = arith.constant 0 : i32
    return %c0_i32, %c0_i32_0 : i32, i32
  }
  func.func @transform_4(%arg0: i32) -> (i32, i32) {
    %c0_i32 = arith.constant 0 : i32
    %c0_i32_0 = arith.constant 0 : i32
    %c0_i32_1 = arith.constant 0 : i32
    return %c0_i32, %c0_i32_0 : i32, i32
  }
  func.func @transform_5(%arg0: i32) -> (i32, i32) {
    %c0_i32 = arith.constant 0 : i32
    %c0_i32_0 = arith.constant 0 : i32
    %c0_i32_1 = arith.constant 0 : i32
    return %c0_i32, %c0_i32_0 : i32, i32
  }
  func.func @transform_6(%arg0: i32) -> (i32, i32) {
    %c0_i32 = arith.constant 0 : i32
    %c0_i32_0 = arith.constant 0 : i32
    %c0_i32_1 = arith.constant 0 : i32
    return %c0_i32, %c0_i32_0 : i32, i32
  }
  func.func @transform_7(%arg0: i32) -> (i32, i32, i32) {
    %c0_i32 = arith.constant 0 : i32
    %c0_i32_0 = arith.constant 0 : i32
    %c0_i32_1 = arith.constant 0 : i32
    return %arg0, %c0_i32, %c0_i32_0 : i32, i32, i32
  }
}

</mosaic_0001>

<llo_original>
// kernel: tpu_custom_call.1
$region0: #{tpu_custom_call.1}
  #allocation0 [shape = 'u32[]', space=smem, size = 0x4, offset = 0x4, fixed_abs, tag = 'smem constant byte address 0x4 - core index']
  #allocation1 [shape = 'u32[72,128]{1,0:T(1,128)}', space=vmem, size = 0x9000, scoped, tag = 'internal scratch']
  #allocation2 [shape = 'f32[1,1]{1,0:T(1,128)S(1)}', space=vmem, size = 0x200, scoped, tag = 'scoped memory for tpu_custom_call.1']
  %s0 = inlined_call_operand.vmem [shape: f32[512,32], index: 0, kind: input, shape index: {}]
  %s1 = inlined_call_operand.vmem [shape: bf16[32,32], index: 1, kind: input, shape index: {}]
  %s2 = inlined_call_operand.vmem [shape: f32[32,1], index: 2, kind: input, shape index: {}]
  %s3 = inlined_call_operand.vmem [shape: bf16[32,32], index: 3, kind: input, shape index: {}]
  %s4 = inlined_call_operand.vmem [shape: f32[32,1], index: 4, kind: input, shape index: {}]
  %s5 = inlined_call_operand.vmem [shape: bf16[1,32], index: 5, kind: input, shape index: {}]
  %s6 = inlined_call_operand.<no memory space> [shape: f32[1,1], index: 6, kind: input, shape index: {}]
  %s7 = inlined_call_operand.hbm [shape: f32[2,1,256], index: 7, kind: output, shape index: {}]
  %s8 = sld [smem:[#allocation0]]
  $region61: #{tpu_custom_call.1} parent=0
    _
  %s10 = ssub.s32 1, %s8
  %s11 = scalar_select 0, %s10, %s8
  %v12 = vstv %s6
  %13 = vst [vmem:[#allocation2] sm:$0x1] %v12
  $region1: #{tpu_custom_call.1} parent=0
    #allocation3 [shape = 'u8[2048]{0}', space=vmem, size = 0x800, scoped, tag = 'output window, operand 0']
    #allocation4 [shape = 's32[2]{0}', space=sflag, size = 0x8, scoped, tag = 'scoped memory for tpu_custom_call.1']
    %14 = vsyncpa [#allocation4], 0
    %s15 = scalar_lea.sflag [#allocation4], 1
    %16 = vsyncpa %s15, 0
    loop: start=0, step=1, limit=4
    $region2: #{tpu_custom_call.1} parent=1 // loop_pre_header
      _
    $region3: #{tpu_custom_call.1} parent=1 // loop_header
      %s18 = sphi 0, %s22
      %p19 = scmp.ge.s32.totalorder %s18, 4
      %s28 = sphi 0, %s30
      %s31 = sphi 0, %s28
      %s32 = sphi 0, %s31
      %s48 = sphi 0, %s32
      %s52 = sphi 0, %s52
      %s54 = sphi 0, %s52
      %s55 = sphi 0, %s54
      %s69 = sphi 0, %s55
      %s73 = sphi 0, %s73
      %s75 = sphi 0, %s73
      %s76 = sphi 0, %s75
      %s90 = sphi 0, %s76
      %s94 = sphi 0, %s94
      %s96 = sphi 0, %s94
      %s97 = sphi 0, %s96
      %s111 = sphi 0, %s97
      %s115 = sphi 0, %s115
      %s117 = sphi 0, %s115
      %s118 = sphi 0, %s117
      %s132 = sphi 0, %s118
      %s136 = sphi 0, %s136
      %s138 = sphi 0, %s136
      %s139 = sphi 0, %s138
      %s153 = sphi 0, %s139
      %s157 = sphi 0, %s157
      %s159 = sphi 0, %s157
      %s160 = sphi 0, %s159
      %s174 = sphi 0, %s160
      %s180 = sphi 0, %s182
      %s183 = sphi 0, %s180
      %s184 = sphi 0, %s183
      %s200 = sphi 0, %s184
    $region4: #{tpu_custom_call.1} parent=1 // loop_header_branch
      %21 = sbr.rel (%p19) target = $region8
    $region5: #{tpu_custom_call.1} parent=1 // loop_body
      %s23 = ssub.s32 %s18, 1
      %s24 = ssub.s32 %s18, 2
      %s25 = sadd.s32 %s18, 1
      %s26 = ssub.s32 %s18, %s25
      %p27 = scmp.eq.s32.totalorder %s26, 0
      %s29 = sadd.s32 %s28, 1
      %s30 = scalar_select %p27, %s28, %s29
      %p33 = pneg %p27
      %p34 = scmp.eq.s32.totalorder %s18, 1
      %p35 = por %p33, %p34
      %p36 = scmp.ne.s32.totalorder %s28, %s31
      %p37 = scmp.eq.s32.totalorder %s18, 0
      %p38 = por %p36, %p37
      %p39 = scmp.ne.s32.totalorder %s28, %s31
      %p40 = scmp.eq.s32.totalorder %s23, 1
      %p41 = por %p39, %p40
      %p42 = scmp.ne.s32.totalorder %s31, %s32
      %p43 = scmp.eq.s32.totalorder %s23, 0
      %p44 = por %p42, %p43
      %p45 = scmp.ne.s32.totalorder %s31, %s32
      %p46 = scmp.eq.s32.totalorder %s24, 1
      %p47 = por %p45, %p46
      %p49 = scmp.ne.s32.totalorder %s32, %s48
      %p50 = scmp.eq.s32.totalorder %s24, 0
      %p51 = por %p49, %p50
      %s53 = sadd.s32 %s52, 1
      %p56 = scmp.eq.s32.totalorder %s18, 1
      %p57 = scmp.ne.s32.totalorder %s52, %s54
      %p58 = scmp.eq.s32.totalorder %s18, 0
      %p59 = por %p57, %p58
      %p60 = scmp.ne.s32.totalorder %s52, %s54
      %p61 = scmp.eq.s32.totalorder %s23, 1
      %p62 = por %p60, %p61
      %p63 = scmp.ne.s32.totalorder %s54, %s55
      %p64 = scmp.eq.s32.totalorder %s23, 0
      %p65 = por %p63, %p64
      %p66 = scmp.ne.s32.totalorder %s54, %s55
      %p67 = scmp.eq.s32.totalorder %s24, 1
      %p68 = por %p66, %p67
      %p70 = scmp.ne.s32.totalorder %s55, %s69
      %p71 = scmp.eq.s32.totalorder %s24, 0
      %p72 = por %p70, %p71
      %s74 = sadd.s32 %s73, 1
      %p77 = scmp.eq.s32.totalorder %s18, 1
      %p78 = scmp.ne.s32.totalorder %s73, %s75
      %p79 = scmp.eq.s32.totalorder %s18, 0
      %p80 = por %p78, %p79
      %p81 = scmp.ne.s32.totalorder %s73, %s75
      %p82 = scmp.eq.s32.totalorder %s23, 1
      %p83 = por %p81, %p82
      %p84 = scmp.ne.s32.totalorder %s75, %s76
      %p85 = scmp.eq.s32.totalorder %s23, 0
      %p86 = por %p84, %p85
      %p87 = scmp.ne.s32.totalorder %s75, %s76
      %p88 = scmp.eq.s32.totalorder %s24, 1
      %p89 = por %p87, %p88
      %p91 = scmp.ne.s32.totalorder %s76, %s90
      %p92 = scmp.eq.s32.totalorder %s24, 0
      %p93 = por %p91, %p92
      %s95 = sadd.s32 %s94, 1
      %p98 = scmp.eq.s32.totalorder %s18, 1
      %p99 = scmp.ne.s32.totalorder %s94, %s96
      %p100 = scmp.eq.s32.totalorder %s18, 0
      %p101 = por %p99, %p100
      %p102 = scmp.ne.s32.totalorder %s94, %s96
      %p103 = scmp.eq.s32.totalorder %s23, 1
      %p104 = por %p102, %p103
      %p105 = scmp.ne.s32.totalorder %s96, %s97
      %p106 = scmp.eq.s32.totalorder %s23, 0
      %p107 = por %p105, %p106
      %p108 = scmp.ne.s32.totalorder %s96, %s97
      %p109 = scmp.eq.s32.totalorder %s24, 1
      %p110 = por %p108, %p109
      %p112 = scmp.ne.s32.totalorder %s97, %s111
      %p113 = scmp.eq.s32.totalorder %s24, 0
      %p114 = por %p112, %p113
      %s116 = sadd.s32 %s115, 1
      %p119 = scmp.eq.s32.totalorder %s18, 1
      %p120 = scmp.ne.s32.totalorder %s115, %s117
      %p121 = scmp.eq.s32.totalorder %s18, 0
      %p122 = por %p120, %p121
      %p123 = scmp.ne.s32.totalorder %s115, %s117
      %p124 = scmp.eq.s32.totalorder %s23, 1
      %p125 = por %p123, %p124
      %p126 = scmp.ne.s32.totalorder %s117, %s118
      %p127 = scmp.eq.s32.totalorder %s23, 0
      %p128 = por %p126, %p127
      %p129 = scmp.ne.s32.totalorder %s117, %s118
      %p130 = scmp.eq.s32.totalorder %s24, 1
      %p131 = por %p129, %p130
      %p133 = scmp.ne.s32.totalorder %s118, %s132
      %p134 = scmp.eq.s32.totalorder %s24, 0
      %p135 = por %p133, %p134
      %s137 = sadd.s32 %s136, 1
      %p140 = scmp.eq.s32.totalorder %s18, 1
      %p141 = scmp.ne.s32.totalorder %s136, %s138
      %p142 = scmp.eq.s32.totalorder %s18, 0
      %p143 = por %p141, %p142
      %p144 = scmp.ne.s32.totalorder %s136, %s138
      %p145 = scmp.eq.s32.totalorder %s23, 1
      %p146 = por %p144, %p145
      %p147 = scmp.ne.s32.totalorder %s138, %s139
      %p148 = scmp.eq.s32.totalorder %s23, 0
      %p149 = por %p147, %p148
      %p150 = scmp.ne.s32.totalorder %s138, %s139
      %p151 = scmp.eq.s32.totalorder %s24, 1
      %p152 = por %p150, %p151
      %p154 = scmp.ne.s32.totalorder %s139, %s153
      %p155 = scmp.eq.s32.totalorder %s24, 0
      %p156 = por %p154, %p155
      %s158 = sadd.s32 %s157, 1
      %p161 = scmp.eq.s32.totalorder %s18, 1
      %p162 = scmp.ne.s32.totalorder %s157, %s159
      %p163 = scmp.eq.s32.totalorder %s18, 0
      %p164 = por %p162, %p163
      %p165 = scmp.ne.s32.totalorder %s157, %s159
      %p166 = scmp.eq.s32.totalorder %s23, 1
      %p167 = por %p165, %p166
      %p168 = scmp.ne.s32.totalorder %s159, %s160
      %p169 = scmp.eq.s32.totalorder %s23, 0
      %p170 = por %p168, %p169
      %p171 = scmp.ne.s32.totalorder %s159, %s160
      %p172 = scmp.eq.s32.totalorder %s24, 1
      %p173 = por %p171, %p172
      %p175 = scmp.ne.s32.totalorder %s160, %s174
      %p176 = scmp.eq.s32.totalorder %s24, 0
      %p177 = por %p175, %p176
      %s178 = ssub.s32 %s18, %s25
      %p179 = scmp.eq.s32.totalorder %s178, 0
      %s181 = sadd.s32 %s180, 1
      %s182 = scalar_select %p179, %s180, %s181
      %p185 = pneg %p179
      %p186 = scmp.eq.s32.totalorder %s18, 1
      %p187 = por %p185, %p186
      %p188 = scmp.ne.s32.totalorder %s180, %s183
      %p189 = scmp.eq.s32.totalorder %s18, 0
      %p190 = por %p188, %p189
      %p191 = scmp.ne.s32.totalorder %s180, %s183
      %p192 = scmp.eq.s32.totalorder %s23, 1
      %p193 = por %p191, %p192
      %p194 = scmp.ne.s32.totalorder %s183, %s184
      %p195 = scmp.eq.s32.totalorder %s23, 0
      %p196 = por %p194, %p195
      %p197 = scmp.ne.s32.totalorder %s183, %s184
      %p198 = scmp.eq.s32.totalorder %s24, 1
      %p199 = por %p197, %p198
      %p201 = scmp.ne.s32.totalorder %s184, %s200
      %p202 = scmp.eq.s32.totalorder %s24, 0
      %p203 = por %p201, %p202
      %p204 = scmp.le.s32.totalorder 1, %s18
      %p205 = scmp.lt.s32.totalorder %s18, 3
      %p206 = pnand %p204, %p205
      %p207 = pneg %p206
      // Predicated region
      $region9: #{tpu_custom_call.1} parent=5 // pred_check
        _
      $region10: #{tpu_custom_call.1} parent=5 // pred_check_branch
        %209 = sbr.rel (%p206) target = $region12
      $region11: #{tpu_custom_call.1} parent=5 // pred_region
        %s210 = ssub.s32 %s18, 1
        // Predicated region
        $region13: #{tpu_custom_call.1} parent=11 // pred_check
          %p211 = pneg %p65
        $region14: #{tpu_custom_call.1} parent=11 // pred_check_branch
          %213 = sbr.rel (%p211) target = $region16
        $region15: #{tpu_custom_call.1} parent=11 // pred_region
          _
        $region16: #{tpu_custom_call.1} parent=11 // pred_fallthru
          _
        // Predicated region
        $region17: #{tpu_custom_call.1} parent=11 // pred_check
          %p214 = pneg %p86
        $region18: #{tpu_custom_call.1} parent=11 // pred_check_branch
          %216 = sbr.rel (%p214) target = $region20
        $region19: #{tpu_custom_call.1} parent=11 // pred_region
          _
        $region20: #{tpu_custom_call.1} parent=11 // pred_fallthru
          _
        // Predicated region
        $region21: #{tpu_custom_call.1} parent=11 // pred_check
          %p217 = pneg %p107
        $region22: #{tpu_custom_call.1} parent=11 // pred_check_branch
          %219 = sbr.rel (%p217) target = $region24
        $region23: #{tpu_custom_call.1} parent=11 // pred_region
          _
        $region24: #{tpu_custom_call.1} parent=11 // pred_fallthru
          _
        // Predicated region
        $region25: #{tpu_custom_call.1} parent=11 // pred_check
          %p220 = pneg %p128
        $region26: #{tpu_custom_call.1} parent=11 // pred_check_branch
          %222 = sbr.rel (%p220) target = $region28
        $region27: #{tpu_custom_call.1} parent=11 // pred_region
          _
        $region28: #{tpu_custom_call.1} parent=11 // pred_fallthru
          _
        // Predicated region
        $region29: #{tpu_custom_call.1} parent=11 // pred_check
          %p223 = pneg %p149
        $region30: #{tpu_custom_call.1} parent=11 // pred_check_branch
          %225 = sbr.rel (%p223) target = $region32
        $region31: #{tpu_custom_call.1} parent=11 // pred_region
          _
        $region32: #{tpu_custom_call.1} parent=11 // pred_fallthru
          _
        // Predicated region
        $region33: #{tpu_custom_call.1} parent=11 // pred_check
          %p226 = pneg %p170
        $region34: #{tpu_custom_call.1} parent=11 // pred_check_branch
          %228 = sbr.rel (%p226) target = $region36
        $region35: #{tpu_custom_call.1} parent=11 // pred_region
          _
        $region36: #{tpu_custom_call.1} parent=11 // pred_fallthru
          _
      $region12: #{tpu_custom_call.1} parent=5 // pred_fallthru
        _
      %p229 = scmp.lt.s32.totalorder %s18, 2
      // Predicated region
      $region37: #{tpu_custom_call.1} parent=5 // pred_check
        %p230 = pneg %p229
      $region38: #{tpu_custom_call.1} parent=5 // pred_check_branch
        %232 = sbr.rel (%p230) target = $region40
      $region39: #{tpu_custom_call.1} parent=5 // pred_region
        // Predicated region
        $region41: #{tpu_custom_call.1} parent=39 // pred_check
          %p233 = pneg %p38
        $region42: #{tpu_custom_call.1} parent=39 // pred_check_branch
          %235 = sbr.rel (%p233) target = $region44
        $region43: #{tpu_custom_call.1} parent=39 // pred_region
          %s236 = smul.u32 32, %s18
          %p237 = scmp.lt.s32.totalorder %s236, 63
          %s238 = scalar_select %p237, %s236, 63
          %s239 = smul.addr %s238, 8
          %s240 = scalar_lea.vmem %s0, %s239
          %s241 = smul.u32 32, %s18
        $region44: #{tpu_custom_call.1} parent=39 // pred_fallthru
          _
      $region40: #{tpu_custom_call.1} parent=5 // pred_fallthru
        _
      %p242 = scmp.le.s32.totalorder 1, %s18
      %p243 = scmp.lt.s32.totalorder %s18, 3
      %p244 = pnand %p242, %p243
      %p245 = pneg %p244
      // Predicated region
      $region45: #{tpu_custom_call.1} parent=5 // pred_check
        _
      $region46: #{tpu_custom_call.1} parent=5 // pred_check_branch
        %247 = sbr.rel (%p244) target = $region48
      $region47: #{tpu_custom_call.1} parent=5 // pred_region
        %s248 = ssub.s32 %s18, 1
        %s249 = smul.u32 32, %s23
        %p250 = scmp.lt.s32.totalorder %s249, 63
        %s251 = scalar_select %p250, %s249, 63
        %s252 = smul.addr %s251, 8
        %s253 = scalar_lea.vmem %s0, %s252
        %p254 = pneg %p44
        %p255 = pneg %p41
        %p256 = pneg %p65
        %p257 = pneg %p62
        %p258 = pneg %p86
        %p259 = pneg %p83
        %p260 = pneg %p107
        %p261 = pneg %p104
        %p262 = pneg %p128
        %p263 = pneg %p125
        %p264 = pneg %p149
        %p265 = pneg %p146
        %p266 = pneg %p170
        %p267 = pneg %p167
        %p268 = pneg %p196
        %p269 = pneg %p193
        %s270 = sand.u32 %s183, 1
        %s271 = scalar_lea.sflag [#allocation4], %s270
        %s272 = sand.u32 %s183, 1
        %s273 = smul.addr %s272, 2
        %s274 = scalar_lea.vmem [#allocation3], %s273
        %s275 = smul.u32 32, %s23
        %p276 = scmp.lt.s32.totalorder %s275, 63
        %s277 = scalar_select %p276, %s275, 63
        %s278 = smul.addr %s277, 8
        %s279 = scalar_lea.vmem %s0, %s278
        %s280 = smul.u32 32, %s23
        %v282 = vld [vmem:[%s1] sm:$0xf]
        %v283 = vld [vmem:[%s1 + $0x4] sm:$0xf]
        %v284 = vld [vmem:[%s1 + $0x8] sm:$0xf]
        %v285 = vld [vmem:[%s1 + $0xc] sm:$0xf]
        %v286 = vld [vmem:[%s3] sm:$0xf]
        %v287 = vld [vmem:[%s3 + $0x4] sm:$0xf]
        %v288 = vld [vmem:[%s3 + $0x8] sm:$0xf]
        %v289 = vld [vmem:[%s3 + $0xc] sm:$0xf]
        %v290 = vld [vmem:[%s5] sm:$0x1]
        %v291 = vld [vmem:[%s2] sm:$0xff]
        %v292 = vld [vmem:[%s2 + $0x8] sm:$0xff]
        %v293 = vld [vmem:[%s2 + $0x10] sm:$0xff]
        %v294 = vld [vmem:[%s2 + $0x18] sm:$0xff]
        %296 = vset.pattern.permute.xlu0 0
        %297 = vperm.xlu0 %296, %v291
        %v298 = vpop.permute.xlu0 %297
        %301 = vset.pattern.permute.xlu0 0
        %302 = vperm.xlu0 %301, %v292
        %v303 = vpop.permute.xlu0 %302
        %306 = vset.pattern.permute.xlu0 0
        %307 = vperm.xlu0 %306, %v293
        %v308 = vpop.permute.xlu0 %307
        %311 = vset.pattern.permute.xlu0 0
        %312 = vperm.xlu0 %311, %v294
        %v313 = vpop.permute.xlu0 %312
        %v315 = vld [vmem:[%s4] sm:$0xff]
        %v316 = vld [vmem:[%s4 + $0x8] sm:$0xff]
        %v317 = vld [vmem:[%s4 + $0x10] sm:$0xff]
        %v318 = vld [vmem:[%s4 + $0x18] sm:$0xff]
        %320 = vset.pattern.permute.xlu0 0
        %321 = vperm.xlu0 %320, %v315
        %v322 = vpop.permute.xlu0 %321
        %325 = vset.pattern.permute.xlu0 0
        %326 = vperm.xlu0 %325, %v316
        %v327 = vpop.permute.xlu0 %326
        %330 = vset.pattern.permute.xlu0 0
        %331 = vperm.xlu0 %330, %v317
        %v332 = vpop.permute.xlu0 %331
        %335 = vset.pattern.permute.xlu0 0
        %336 = vperm.xlu0 %335, %v318
        %v337 = vpop.permute.xlu0 %336
        %v339 = vld [vmem:[#allocation2] sm:$0x1]
        %341 = vset.pattern.permute.xlu0 0
        %342 = vperm.xlu0 %341, %v339
        %v343 = vpop.permute.xlu0 %342
        %v345 = vperm.slane %v343, 0
        %v346 = vld [vmem:[%s279] sm:$0xff]
        %v347 = vld [vmem:[%s279 + $0x8] sm:$0xff]
        %v348 = vld [vmem:[%s279 + $0x10] sm:$0xff]
        %v349 = vld [vmem:[%s279 + $0x18] sm:$0xff]
        %v350 = vld [vmem:[%s279 + $0x20] sm:$0xff]
        %v351 = vld [vmem:[%s279 + $0x28] sm:$0xff]
        %v352 = vld [vmem:[%s279 + $0x30] sm:$0xff]
        %v353 = vld [vmem:[%s279 + $0x38] sm:$0xff]
        %v354 = vld [vmem:[%s279 + $0x40] sm:$0xff]
        %v355 = vld [vmem:[%s279 + $0x48] sm:$0xff]
        %v356 = vld [vmem:[%s279 + $0x50] sm:$0xff]
        %v357 = vld [vmem:[%s279 + $0x58] sm:$0xff]
        %v358 = vld [vmem:[%s279 + $0x60] sm:$0xff]
        %v359 = vld [vmem:[%s279 + $0x68] sm:$0xff]
        %v360 = vld [vmem:[%s279 + $0x70] sm:$0xff]
        %v361 = vld [vmem:[%s279 + $0x78] sm:$0xff]
        %v362 = vld [vmem:[%s279 + $0x80] sm:$0xff]
        %v363 = vld [vmem:[%s279 + $0x88] sm:$0xff]
        %v364 = vld [vmem:[%s279 + $0x90] sm:$0xff]
        %v365 = vld [vmem:[%s279 + $0x98] sm:$0xff]
        %v366 = vld [vmem:[%s279 + $0xa0] sm:$0xff]
        %v367 = vld [vmem:[%s279 + $0xa8] sm:$0xff]
        %v368 = vld [vmem:[%s279 + $0xb0] sm:$0xff]
        %v369 = vld [vmem:[%s279 + $0xb8] sm:$0xff]
        %v370 = vld [vmem:[%s279 + $0xc0] sm:$0xff]
        %v371 = vld [vmem:[%s279 + $0xc8] sm:$0xff]
        %v372 = vld [vmem:[%s279 + $0xd0] sm:$0xff]
        %v373 = vld [vmem:[%s279 + $0xd8] sm:$0xff]
        %v374 = vld [vmem:[%s279 + $0xe0] sm:$0xff]
        %v375 = vld [vmem:[%s279 + $0xe8] sm:$0xff]
        %v376 = vld [vmem:[%s279 + $0xf0] sm:$0xff]
        %v377 = vld [vmem:[%s279 + $0xf8] sm:$0xff]
        %378 = vxpose.xlu0.b32.start [1/16] %v346, 128
        %379 = vxpose.xlu0.b32.cont [2/16] %v347, 128
        %380 = vxpose.xlu0.b32.cont [3/16] %v348, 128
        %381 = vxpose.xlu0.b32.cont [4/16] %v349, 128
        %382 = vxpose.xlu0.b32.cont [5/16] %v350, 128
        %383 = vxpose.xlu0.b32.cont [6/16] %v351, 128
        %384 = vxpose.xlu0.b32.cont [7/16] %v352, 128
        %385 = vxpose.xlu0.b32.cont [8/16] %v353, 128
        %386 = vxpose.xlu0.b32.cont [9/16] %v354, 128
        %387 = vxpose.xlu0.b32.cont [10/16] %v355, 128
        %388 = vxpose.xlu0.b32.cont [11/16] %v356, 128
        %389 = vxpose.xlu0.b32.cont [12/16] %v357, 128
        %390 = vxpose.xlu0.b32.cont [13/16] %v358, 128
        %391 = vxpose.xlu0.b32.cont [14/16] %v359, 128
        %392 = vxpose.xlu0.b32.cont [15/16] %v360, 128
        %393 = vxpose.xlu0.b32.end [16/16] %v361, 128
        %v394 = vpop.trf.xlu0
        %v395 = vpop.trf.xlu0
        %v396 = vpop.trf.xlu0
        %v397 = vpop.trf.xlu0
        %v398 = vpop.trf.xlu0
        %v399 = vpop.trf.xlu0
        %v400 = vpop.trf.xlu0
        %v401 = vpop.trf.xlu0
        %v402 = vpop.trf.xlu0
        %v403 = vpop.trf.xlu0
        %v404 = vpop.trf.xlu0
        %v405 = vpop.trf.xlu0
        %v406 = vpop.trf.xlu0
        %v407 = vpop.trf.xlu0
        %v408 = vpop.trf.xlu0
        %v409 = vpop.trf.xlu0
        %410 = vxpose.xlu0.b32.start [1/16] %v362, 128
        %411 = vxpose.xlu0.b32.cont [2/16] %v363, 128
        %412 = vxpose.xlu0.b32.cont [3/16] %v364, 128
        %413 = vxpose.xlu0.b32.cont [4/16] %v365, 128
        %414 = vxpose.xlu0.b32.cont [5/16] %v366, 128
        %415 = vxpose.xlu0.b32.cont [6/16] %v367, 128
        %416 = vxpose.xlu0.b32.cont [7/16] %v368, 128
        %417 = vxpose.xlu0.b32.cont [8/16] %v369, 128
        %418 = vxpose.xlu0.b32.cont [9/16] %v370, 128
        %419 = vxpose.xlu0.b32.cont [10/16] %v371, 128
        %420 = vxpose.xlu0.b32.cont [11/16] %v372, 128
        %421 = vxpose.xlu0.b32.cont [12/16] %v373, 128
        %422 = vxpose.xlu0.b32.cont [13/16] %v374, 128
        %423 = vxpose.xlu0.b32.cont [14/16] %v375, 128
        %424 = vxpose.xlu0.b32.cont [15/16] %v376, 128
        %425 = vxpose.xlu0.b32.end [16/16] %v377, 128
        %v426 = vpop.trf.xlu0
        %v427 = vpop.trf.xlu0
        %v428 = vpop.trf.xlu0
        %v429 = vpop.trf.xlu0
        %v430 = vpop.trf.xlu0
        %v431 = vpop.trf.xlu0
        %v432 = vpop.trf.xlu0
        %v433 = vpop.trf.xlu0
        %v434 = vpop.trf.xlu0
        %v435 = vpop.trf.xlu0
        %v436 = vpop.trf.xlu0
        %v437 = vpop.trf.xlu0
        %v438 = vpop.trf.xlu0
        %v439 = vpop.trf.xlu0
        %v440 = vpop.trf.xlu0
        %v441 = vpop.trf.xlu0
        %v442 = vpack.c.bf16 %v395, %v394
        %v443 = vpack.c.bf16 %v427, %v426
        %v444 = vpack.c.bf16 %v397, %v396
        %v445 = vpack.c.bf16 %v429, %v428
        %v450 = vunpack.c.l.b16 %v282
        %v451 = vunpack.c.l.b16 %v283
        %v452 = vunpack.c.l.b16 %v284
        %v453 = vunpack.c.l.b16 %v285
        %v454 = vpack.c.b16 %v451, %v450
        %v455 = vpack.c.b16 %v453, %v452
        %vm456 = vcmask 261120
        %v458 = vsel %vm456, %v454, 0
        %v461 = vsel %vm456, %v455, 0
        %463 = vmatpush.bf16.msra.mxu0 0
        %464 = vmatpush.bf16.msra.mxu0 0
        %465 = vmatpush.bf16.msra.mxu0 0
        %466 = vmatpush.bf16.msra.mxu0 0
        %467 = vmatpush.bf16.msra.mxu0 0
        %468 = vmatpush.bf16.msra.mxu0 0
        %469 = vmatpush.bf16.msra.mxu0 %v444
        %470 = vmatpush.bf16.msra.mxu0 %v442
        %471 = vmatmul.bf16.gmra.mxu0 %v458
        %v472 = vpop.f32.mrf.mxu0
        %v473 = vadd.f32 %v298, %v472
        %v474 = vpop.f32.mrf.mxu0
        %v475 = vadd.f32 %v303, %v474
        %476 = vmatmul.bf16.gmra.mxu0 %v461
        %v477 = vpop.f32.mrf.mxu0
        %v478 = vadd.f32 %v308, %v477
        %v479 = vpop.f32.mrf.mxu0
        %v480 = vadd.f32 %v313, %v479
        %481 = vdwg.mxu0
        %482 = vmatpush.bf16.msra.mxu0 0
        %483 = vmatpush.bf16.msra.mxu0 0
        %484 = vmatpush.bf16.msra.mxu0 0
        %485 = vmatpush.bf16.msra.mxu0 0
        %486 = vmatpush.bf16.msra.mxu0 0
        %487 = vmatpush.bf16.msra.mxu0 0
        %488 = vmatpush.bf16.msra.mxu0 %v445
        %489 = vmatpush.bf16.msra.mxu0 %v443
        %490 = vmatmul.bf16.gmra.mxu0 %v458
        %v491 = vpop.f32.mrf.mxu0
        %v492 = vadd.f32 %v298, %v491
        %v493 = vpop.f32.mrf.mxu0
        %v494 = vadd.f32 %v303, %v493
        %495 = vmatmul.bf16.gmra.mxu0 %v461
        %v496 = vpop.f32.mrf.mxu0
        %v497 = vadd.f32 %v308, %v496
        %v498 = vpop.f32.mrf.mxu0
        %v499 = vadd.f32 %v313, %v498
        %500 = vdwg.mxu0
        %v501 = vmax.f32 %v473, 0.0
        %v502 = vmax.f32 %v492, 0.0
        %v503 = vmax.f32 %v475, 0.0
        %v504 = vmax.f32 %v494, 0.0
        %v505 = vmax.f32 %v478, 0.0
        %v506 = vmax.f32 %v497, 0.0
        %v507 = vmax.f32 %v480, 0.0
        %v508 = vmax.f32 %v499, 0.0
        %v509 = vpack.c.bf16 %v503, %v501
        %v510 = vpack.c.bf16 %v504, %v502
        %v511 = vpack.c.bf16 %v507, %v505
        %v512 = vpack.c.bf16 %v508, %v506
        %v517 = vunpack.c.l.b16 %v286
        %v518 = vunpack.c.l.b16 %v287
        %v519 = vunpack.c.l.b16 %v288
        %v520 = vunpack.c.l.b16 %v289
        %v521 = vpack.c.b16 %v518, %v517
        %v522 = vpack.c.b16 %v520, %v519
        %v524 = vsel %vm456, %v521, 0
        %v527 = vsel %vm456, %v522, 0
        %529 = vmatpush.bf16.msra.mxu0 0
        %530 = vmatpush.bf16.msra.mxu0 0
        %531 = vmatpush.bf16.msra.mxu0 0
        %532 = vmatpush.bf16.msra.mxu0 0
        %533 = vmatpush.bf16.msra.mxu0 0
        %534 = vmatpush.bf16.msra.mxu0 0
        %535 = vmatpush.bf16.msra.mxu0 %v511
        %536 = vmatpush.bf16.msra.mxu0 %v509
        %537 = vmatmul.bf16.gmra.mxu0 %v524
        %v538 = vpop.f32.mrf.mxu0
        %v539 = vadd.f32 %v322, %v538
        %v540 = vpop.f32.mrf.mxu0
        %v541 = vadd.f32 %v327, %v540
        %542 = vmatmul.bf16.gmra.mxu0 %v527
        %v543 = vpop.f32.mrf.mxu0
        %v544 = vadd.f32 %v332, %v543
        %v545 = vpop.f32.mrf.mxu0
        %v546 = vadd.f32 %v337, %v545
        %547 = vdwg.mxu0
        %548 = vmatpush.bf16.msra.mxu0 0
        %549 = vmatpush.bf16.msra.mxu0 0
        %550 = vmatpush.bf16.msra.mxu0 0
        %551 = vmatpush.bf16.msra.mxu0 0
        %552 = vmatpush.bf16.msra.mxu0 0
        %553 = vmatpush.bf16.msra.mxu0 0
        %554 = vmatpush.bf16.msra.mxu0 %v512
        %555 = vmatpush.bf16.msra.mxu0 %v510
        %556 = vmatmul.bf16.gmra.mxu0 %v524
        %v557 = vpop.f32.mrf.mxu0
        %v558 = vadd.f32 %v322, %v557
        %v559 = vpop.f32.mrf.mxu0
        %v560 = vadd.f32 %v327, %v559
        %561 = vmatmul.bf16.gmra.mxu0 %v527
        %v562 = vpop.f32.mrf.mxu0
        %v563 = vadd.f32 %v332, %v562
        %v564 = vpop.f32.mrf.mxu0
        %v565 = vadd.f32 %v337, %v564
        %566 = vdwg.mxu0
        %v567 = vmax.f32 %v539, 0.0
        %v568 = vmax.f32 %v558, 0.0
        %v569 = vmax.f32 %v541, 0.0
        %v570 = vmax.f32 %v560, 0.0
        %v571 = vmax.f32 %v544, 0.0
        %v572 = vmax.f32 %v563, 0.0
        %v573 = vmax.f32 %v546, 0.0
        %v574 = vmax.f32 %v565, 0.0
        %v575 = vpack.c.bf16 %v569, %v567
        %v576 = vpack.c.bf16 %v570, %v568
        %v577 = vpack.c.bf16 %v573, %v571
        %v578 = vpack.c.bf16 %v574, %v572
        %v580 = vsel %vm456, %v290, 0
        %582 = vmatpush.bf16.msra.mxu0 0
        %583 = vmatpush.bf16.msra.mxu0 0
        %584 = vmatpush.bf16.msra.mxu0 0
        %585 = vmatpush.bf16.msra.mxu0 0
        %586 = vmatpush.bf16.msra.mxu0 0
        %587 = vmatpush.bf16.msra.mxu0 0
        %588 = vmatpush.bf16.msra.mxu0 %v577
        %589 = vmatpush.bf16.msra.mxu0 %v575
        %590 = vmatmul.bf16.gmra.mxu0 %v580
        %v591 = vpop.f32.mrf.mxu0
        %v592 = vadd.f32 %v345, %v591
        %v593 = vpop.f32.mrf.mxu0
        %594 = vdwg.mxu0
        %595 = vmatpush.bf16.msra.mxu0 0
        %596 = vmatpush.bf16.msra.mxu0 0
        %597 = vmatpush.bf16.msra.mxu0 0
        %598 = vmatpush.bf16.msra.mxu0 0
        %599 = vmatpush.bf16.msra.mxu0 0
        %600 = vmatpush.bf16.msra.mxu0 0
        %601 = vmatpush.bf16.msra.mxu0 %v578
        %602 = vmatpush.bf16.msra.mxu0 %v576
        %603 = vmatmul.bf16.gmra.mxu0 %v580
        %v604 = vpop.f32.mrf.mxu0
        %v605 = vadd.f32 %v345, %v604
        %v606 = vpop.f32.mrf.mxu0
        %607 = vdwg.mxu0
        %v610 = vrot.slane %v605, 7
        %vm611 = vcmask 1040384
        %v612 = vsel %vm611, %v592, %v610
        %v614 = vlaneseq
        %vm615 = vcmp.ge.s32.totalorder %v614, 0
        %vm616 = vcmp.lt.s32.totalorder %v614, 256
        %vm617 = vmand %vm615, %vm616
        %618 = vst.msk [vmem:[%s274] sm:$0x3] %vm617, %v612
        %s619 = sand.u32 %s183, 1
        %s620 = scalar_lea.sflag [#allocation4], %s619
        %s621 = sand.u32 %s183, 1
        %s622 = smul.addr %s621, 2
        %s623 = scalar_lea.vmem [#allocation3], %s622
        // Predicated region
        $region49: #{tpu_custom_call.1} parent=47 // pred_check
          %p624 = pneg %p193
        $region50: #{tpu_custom_call.1} parent=47 // pred_check_branch
          %626 = sbr.rel (%p624) target = $region52
        $region51: #{tpu_custom_call.1} parent=47 // pred_region
          %628 = vsyncadd %s620, 0
          %s629 = smul.addr %s23, 2
          %s630 = scalar_lea.hbm %s7, %s629
          %s632 = sshll.u32 %s623, 4
          %s633 = int_to_ptr.vmem [resolvable:$true] %s632
          %s634 = sshll.u32 %s630, 4
          %s635 = int_to_ptr.hbm [resolvable:$true] %s634
          %637 = dma.vmem_to_hbm [thread:$0]  %s633, 32, %s635, %s620
        $region52: #{tpu_custom_call.1} parent=47 // pred_fallthru
          _
      $region48: #{tpu_custom_call.1} parent=5 // pred_fallthru
        _
      %p638 = scmp.le.s32.totalorder 2, %s18
      // Predicated region
      $region53: #{tpu_custom_call.1} parent=5 // pred_check
        %p639 = pneg %p638
      $region54: #{tpu_custom_call.1} parent=5 // pred_check_branch
        %641 = sbr.rel (%p639) target = $region56
      $region55: #{tpu_custom_call.1} parent=5 // pred_region
        %s642 = ssub.s32 %s18, 2
        // Predicated region
        $region57: #{tpu_custom_call.1} parent=55 // pred_check
          %p643 = pneg %p199
        $region58: #{tpu_custom_call.1} parent=55 // pred_check_branch
          %645 = sbr.rel (%p643) target = $region60
        $region59: #{tpu_custom_call.1} parent=55 // pred_region
          %s646 = sand.u32 %s184, 1
          %s647 = scalar_lea.sflag [#allocation4], %s646
          %s648 = sand.u32 %s184, 1
          %s649 = smul.addr %s648, 2
          %s650 = scalar_lea.vmem [#allocation3], %s649
          %652 = dma.done %s647, 32
        $region60: #{tpu_custom_call.1} parent=55 // pred_fallthru
          _
      $region56: #{tpu_custom_call.1} parent=5 // pred_fallthru
        _
    $region6: #{tpu_custom_call.1} parent=1 // loop_footer
      %s22 = sadd.s32 1, %s18
    $region7: #{tpu_custom_call.1} parent=1 // loop_footer_branch
      %17 = sbr.rel target = $region3
    $region8: #{tpu_custom_call.1} parent=1 // loop_exit
      _
    %653 = vsyncpa [#allocation4], 1
    %s654 = scalar_lea.sflag [#allocation4], 1
    %655 = vsyncpa %s654, 1

</llo_original>
